<compile_context>
chip_gen: v5e
topology: v5e:2x2
jax: 0.10.0
libtpu: 0.0.40
codegen_flags: <defaults>
</compile_context>

<pallas_src>
import math

import jax
import jax.numpy as jnp
from jax.experimental import pallas as pl
from jax.experimental.pallas import tpu as pltpu


def _round_up(n: int, m: int) -> int:
    return ((n + m - 1) // m) * m


def _sublane_pack(dtype) -> int:
    # second-minor packing tile per dtype width
    return {4: 8, 2: 16, 1: 32}.get(jnp.dtype(dtype).itemsize, 8)


def _vmem_capacity_bytes() -> int:
    """Generation-aware VMEM capacity (per TensorCore), with a conservative fallback."""
    try:
        cap = int(pltpu.get_tpu_info().vmem_capacity_bytes)
        if cap > 0:
            return cap
    except Exception:
        pass
    return 64 << 20   # v7x per-TC size; safe lower bound for v5e/v6e too


def _activation_fn(name):
    if name == "relu":
        return lambda h: jnp.maximum(h, 0.0)
    if name == "gelu":
        # exact erf form == torch.nn.GELU default
        return lambda h: jax.nn.gelu(h, approximate=False)
    if name == "tanh":
        return jnp.tanh
    if name == "sigmoid":
        return jax.nn.sigmoid
    raise ValueError(f"Unknown activation: {name}")


def _make_ffn_kernel(*, activation, use_layer_norm, use_residual, ln_eps,
                     d_out_valid, d_out_padded):
    """Fused FFN kernel body with a hidden-dim (k) reduction grid axis."""
    act = _activation_fn(activation)

    def _body(x_ref, w1_ref, b1_ref, w2_ref, b2_ref, g_ref, be_ref, o_ref, acc_ref):
        k = pl.program_id(1)

        @pl.when(k == 0)
        def _():
            acc_ref[...] = jnp.zeros_like(acc_ref)

        x = x_ref[...]                                           # (tm, Din_p), native dtype

        # --- linear1 chunk: MXU in matmul dtype, f32 accumulator ---
        h = jnp.dot(x.astype(w1_ref.dtype), w1_ref[...],
                    preferred_element_type=jnp.float32)
        h = act(h + b1_ref[...].astype(jnp.float32))

        # --- linear2 chunk: accumulate into resident f32 scratch ---
        acc_ref[...] += jnp.dot(h.astype(w2_ref.dtype), w2_ref[...],
                                preferred_element_type=jnp.float32)

        @pl.when(k == pl.num_programs(1) - 1)
        def _():
            y = acc_ref[...] + b2_ref[...].astype(jnp.float32)

            # --- optional layer norm (stats over VALID output columns only) ---
            if use_layer_norm:
                if d_out_valid == d_out_padded:
                    mean = jnp.mean(y, axis=-1, keepdims=True)
                    var = jnp.mean((y - mean) ** 2, axis=-1, keepdims=True)
                else:
                    col = jax.lax.broadcasted_iota(jnp.int32, y.shape, 1)
                    mask = (col < d_out_valid).astype(jnp.float32)
                    inv_n = 1.0 / float(d_out_valid)
                    mean = jnp.sum(y * mask, axis=-1, keepdims=True) * inv_n
                    var = jnp.sum(((y - mean) * mask) ** 2, axis=-1, keepdims=True) * inv_n
                y = (y - mean) * jax.lax.rsqrt(var + ln_eps)
                y = y * g_ref[...].astype(jnp.float32) + be_ref[...].astype(jnp.float32)

            # dropout: eval mode / p=0.0 -> identity
            # TODO(synk): training-mode dropout would need pltpu.prng_seed/prng_random_bits.

            if use_residual:
                y = y + x.astype(jnp.float32)

            o_ref[...] = y.astype(o_ref.dtype)

    if use_layer_norm:
        def kernel(x_ref, w1_ref, b1_ref, w2_ref, b2_ref, g_ref, be_ref, o_ref, acc_ref):
            _body(x_ref, w1_ref, b1_ref, w2_ref, b2_ref, g_ref, be_ref, o_ref, acc_ref)
    else:
        def kernel(x_ref, w1_ref, b1_ref, w2_ref, b2_ref, o_ref, acc_ref):
            _body(x_ref, w1_ref, b1_ref, w2_ref, b2_ref, None, None, o_ref, acc_ref)
    return kernel


def make_feed_forward_block(w1, b1, w2, b2, gamma=None, beta=None, *,
                            activation="relu", use_layer_norm=False,
                            use_residual=False, ln_eps=1e-5,
                            matmul_dtype=jnp.bfloat16,
                            tile_rows=512, hidden_tile=None):
    """Prepare (pad + cast) parameters once and return an `apply(x)` callable.

    w1: [D_in, D_hid], w2: [D_hid, D_out]; biases broadcastable to (1, dim).
    matmul_dtype: dtype fed to the MXU (None = keep native); accumulation is f32.
    """
    d_in, d_hid = w1.shape
    d_out = w2.shape[1]
    use_residual = bool(use_residual and d_in == d_out)   # mirrors the PyTorch module

    mxu_dt = jnp.dtype(matmul_dtype) if matmul_dtype is not None else jnp.dtype(w1.dtype)
    w_itemsize = mxu_dt.itemsize

    # lane-dense padding targets
    d_in_p = _round_up(d_in, 128)
    d_hid_p = _round_up(d_hid, 128)
    d_out_p = _round_up(d_out, 128)

    # --- generation-aware VMEM budget (leave headroom for Mosaic internal scratch) ---
    vmem_cap = _vmem_capacity_bytes()
    budget = int(vmem_cap * 0.85)

    # --- tile selection: hidden-dim tile tk, row-tile upper bound tm_cap ---
    tm_cap = _round_up(max(int(tile_rows), 8), 256)      # MXU-height multiples

    def _fits(tk, tm):
        nbuf = 1 if tk >= d_hid_p else 2                 # single-buffer resident weights
        fixed = (2 * tm * d_in_p * 4                     # x (double-buffered, f32 worst case)
                 + 2 * tm * d_out_p * 4                  # out (double-buffered)
                 + tm * d_out_p * 4                      # f32 accumulator scratch
                 + (3 if use_layer_norm else 1) * d_out_p * 4)
        per_k = nbuf * (d_in_p * tk + tk * d_out_p + tk) * w_itemsize
        live = 2 * tm * tk * 4                           # f32 h intermediate (+ slack)
        return fixed + per_k + live <= budget

    if hidden_tile is not None:
        tk = min(_round_up(int(hidden_tile), 128), d_hid_p)
    else:
        tk = d_hid_p
    while not _fits(tk, tm_cap):
        if tk > 128:
            tk = _round_up(max(tk // 2, 128), 128)
        elif tm_cap > 256:
            tm_cap = max(256, tm_cap // 2)
        else:
            break

    n_k = (d_hid_p + tk - 1) // tk
    d_hid_pt = n_k * tk                                  # hidden dim padded to tile multiple

    # --- pad + cast parameters ONCE (hoisted out of the per-call path) ---
    w1p = jnp.pad(w1.astype(mxu_dt), ((0, d_in_p - d_in), (0, d_hid_pt - d_hid)))
    b1p = jnp.pad(jnp.reshape(b1, (1, d_hid)), ((0, 0), (0, d_hid_pt - d_hid)))
    w2p = jnp.pad(w2.astype(mxu_dt), ((0, d_hid_pt - d_hid), (0, d_out_p - d_out)))
    b2p = jnp.pad(jnp.reshape(b2, (1, d_out)), ((0, 0), (0, d_out_p - d_out)))
    params = (w1p, b1p, w2p, b2p)
    if use_layer_norm:
        gamma = jnp.ones((d_out,), jnp.float32) if gamma is None else gamma
        beta = jnp.zeros((d_out,), jnp.float32) if beta is None else beta
        gp = jnp.pad(jnp.reshape(gamma, (1, d_out)), ((0, 0), (0, d_out_p - d_out)))
        bp = jnp.pad(jnp.reshape(beta, (1, d_out)), ((0, 0), (0, d_out_p - d_out)))
        params = params + (gp, bp)

    kernel = _make_ffn_kernel(
        activation=activation, use_layer_norm=use_layer_norm,
        use_residual=use_residual, ln_eps=ln_eps,
        d_out_valid=d_out, d_out_padded=d_out_p)

    # single-buffer operands whose block index never changes across the grid
    w_mode = pl.Buffered(1) if n_k == 1 else None
    const_mode = pl.Buffered(1)

    def apply(x):
        orig_shape = x.shape
        assert orig_shape[-1] == d_in, (orig_shape, d_in)
        x2 = x.reshape(-1, d_in)
        rows = x2.shape[0]
        x_item = x2.dtype.itemsize
        pack = _sublane_pack(x2.dtype)

        # Row tile: as large as the budget allows, but >=2 row-grid steps when rows
        # permit so ("parallel", ...) actually shards across the 2 TCs on v7x.
        tm_half = _round_up(max((rows + 1) // 2, 1), pack)
        tm = max(pack, min(_round_up(tm_cap, pack), tm_half))
        rows_p = _round_up(rows, tm)

        xp = jnp.pad(x2, ((0, rows_p - rows), (0, d_in_p - d_in)))

        in_specs = [
            pl.BlockSpec((tm, d_in_p), lambda i, k: (i, 0)),                        # x row tile
            pl.BlockSpec((d_in_p, tk), lambda i, k: (0, k), pipeline_mode=w_mode),  # W1 tile
            pl.BlockSpec((1, tk), lambda i, k: (0, k), pipeline_mode=w_mode),       # b1 tile
            pl.BlockSpec((tk, d_out_p), lambda i, k: (k, 0), pipeline_mode=w_mode), # W2 tile
            pl.BlockSpec((1, d_out_p), lambda i, k: (0, 0), pipeline_mode=const_mode),  # b2
        ]
        if use_layer_norm:
            in_specs += [
                pl.BlockSpec((1, d_out_p), lambda i, k: (0, 0), pipeline_mode=const_mode),  # gamma
                pl.BlockSpec((1, d_out_p), lambda i, k: (0, 0), pipeline_mode=const_mode),  # beta
            ]

        # actual resident footprint + margin, capped by the generation-aware budget
        nbuf = 1 if n_k == 1 else 2
        need = (2 * tm * d_in_p * x_item
                + 2 * tm * d_out_p * x_item
                + tm * d_out_p * 4
                + nbuf * (d_in_p * tk + tk * d_out_p + tk) * w_itemsize
                + (3 if use_layer_norm else 1) * d_out_p * 4
                + 2 * tm * tk * 4)
        vmem_limit = int(min(max(need + (8 << 20), 32 << 20), budget))

        flops = 2 * rows * (d_in * d_hid + d_hid * d_out)
        transcendentals = rows * d_hid if activation in ("gelu", "tanh", "sigmoid") else 0
        bytes_accessed = (x_item * rows * (d_in + d_out)
                          + w_itemsize * (d_in * d_hid + d_hid * d_out)
                          + 4 * (d_hid + d_out))

        out = pl.pallas_call(
            kernel,
            out_shape=jax.ShapeDtypeStruct((rows_p, d_out_p), x2.dtype),
            grid_spec=pltpu.PrefetchScalarGridSpec(
                num_scalar_prefetch=0,
                grid=(rows_p // tm, n_k),                 # reduction (hidden) axis last
                in_specs=in_specs,
                out_specs=pl.BlockSpec((tm, d_out_p), lambda i, k: (i, 0)),
                scratch_shapes=[pltpu.VMEM((tm, d_out_p), jnp.float32)],
            ),
            compiler_params=pltpu.CompilerParams(
                dimension_semantics=("parallel", "arbitrary"),
                vmem_limit_bytes=vmem_limit),
            cost_estimate=pl.CostEstimate(
                flops=flops, transcendentals=transcendentals,
                bytes_accessed=bytes_accessed),
        )(xp, *params)

        out = out[:rows, :d_out]
        return out.reshape(orig_shape[:-1] + (d_out,))

    return jax.jit(apply)


# ----------------------------- test harness ----------------------------------

def _init_params(key, d_in, d_hid, d_out):
    """Deterministic parameter init mirroring the PyTorch module's __init__ shapes."""
    k1, k2 = jax.random.split(key)
    bound1 = math.sqrt(6.0 / d_in)                       # kaiming_uniform (relu), fan_in
    w1 = jax.random.uniform(k1, (d_in, d_hid), jnp.float32, -bound1, bound1)
    b1 = jnp.zeros((1, d_hid), jnp.float32)
    bound2 = math.sqrt(6.0 / (d_hid + d_out))            # xavier_uniform
    w2 = jax.random.uniform(k2, (d_hid, d_out), jnp.float32, -bound2, bound2)
    b2 = jnp.zeros((1, d_out), jnp.float32)
    gamma = jnp.ones((1, d_out), jnp.float32)
    beta = jnp.zeros((1, d_out), jnp.float32)
    return w1, b1, w2, b2, gamma, beta


def _reference(x, w1, b1, w2, b2, gamma, beta, *, activation, use_layer_norm,
               use_residual, ln_eps=1e-5):
    h = x @ w1 + b1
    h = _activation_fn(activation)(h)
    y = h @ w2 + b2
    if use_layer_norm:
        mean = jnp.mean(y, axis=-1, keepdims=True)
        var = jnp.mean((y - mean) ** 2, axis=-1, keepdims=True)
        y = (y - mean) * jax.lax.rsqrt(var + ln_eps) * gamma + beta
    if use_residual and x.shape[-1] == y.shape[-1]:
        y = y + x
    return y


if __name__ == "__main__":
    key = jax.random.PRNGKey(0)
    k1, k2, k3, k4 = jax.random.split(key, 4)

    def run_case(name, *, B, S, d_in, d_hid, d_out, activation, use_layer_norm,
                 use_residual, matmul_dtype, hidden_tile, tol, kx, kp):
        x = jax.random.normal(kx, (B, S, d_in), jnp.float32)
        w1, b1, w2, b2, gamma, beta = _init_params(kp, d_in, d_hid, d_out)
        ffn = make_feed_forward_block(
            w1, b1, w2, b2, gamma, beta,
            activation=activation, use_layer_norm=use_layer_norm,
            use_residual=use_residual, matmul_dtype=matmul_dtype,
            tile_rows=512, hidden_tile=hidden_tile)
        out = jax.block_until_ready(ffn(x))
        ref = _reference(x.reshape(-1, d_in), w1, b1, w2, b2, gamma, beta,
                         activation=activation, use_layer_norm=use_layer_norm,
                         use_residual=use_residual).reshape(B, S, d_out)
        assert out.shape == (B, S, d_out), (name, out.shape)
        assert jnp.allclose(out, ref, rtol=tol, atol=tol), f"{name}: mismatch vs reference"

    # 1) module defaults (relu, hidden=4*input, output=input) with bf16 MXU feed.
    run_case("relu_bf16", B=2, S=8, d_in=16, d_hid=64, d_out=16,
             activation="relu", use_layer_norm=False, use_residual=False,
             matmul_dtype=jnp.bfloat16, hidden_tile=None, tol=3e-2, kx=k1, kp=k2)

    # 2) tanh + layer norm + residual, exact f32 MXU path.
    run_case("tanh_ln_res_f32", B=2, S=8, d_in=16, d_hid=64, d_out=16,
             activation="tanh", use_layer_norm=True, use_residual=True,
             matmul_dtype=None, hidden_tile=None, tol=1e-4, kx=k3, kp=k4)

    # 3) hidden-dim-tiled accumulation path (n_k > 1) with d_out != d_in.
    run_case("sigmoid_ktiled_f32", B=2, S=8, d_in=16, d_hid=256, d_out=32,
             activation="sigmoid", use_layer_norm=False, use_residual=False,
             matmul_dtype=None, hidden_tile=128, tol=5e-4, kx=k1, kp=k3)

    print("KERNEL_OK")
</pallas_src>

<mosaic_0001>
module attributes {stable_mosaic.version = 11 : i64} {
  func.func @kernel(%arg0: i32, %arg1: i32, %arg2: memref<8x128xf32, #tpu.memory_space<vmem>>, %arg3: memref<128x128xbf16, #tpu.memory_space<vmem>>, %arg4: memref<1x128xf32, #tpu.memory_space<vmem>>, %arg5: memref<128x128xbf16, #tpu.memory_space<vmem>>, %arg6: memref<1x128xf32, #tpu.memory_space<vmem>>, %arg7: memref<8x128xf32, #tpu.memory_space<vmem>>, %arg8: memref<8x128xf32, #tpu.memory_space<vmem>>) attributes {dimension_semantics = [#tpu.dimension_semantics<parallel>, #tpu.dimension_semantics<arbitrary>], iteration_bounds = array<i64: 2, 1>, scalar_prefetch = 0 : i64, scratch_operands = 1 : i64, tpu.core_type = #tpu.core_type<tc>, window_params = [{transform_indices = @transform_0, window_bounds = array<i64: 8, 128>}, {pipeline_mode = #tpu.pipeline_mode<synchronous>, transform_indices = @transform_1, window_bounds = array<i64: 128, 128>}, {pipeline_mode = #tpu.pipeline_mode<synchronous>, transform_indices = @transform_2, window_bounds = array<i64: 1, 128>}, {pipeline_mode = #tpu.pipeline_mode<synchronous>, transform_indices = @transform_3, window_bounds = array<i64: 128, 128>}, {pipeline_mode = #tpu.pipeline_mode<synchronous>, transform_indices = @transform_4, window_bounds = array<i64: 1, 128>}, {transform_indices = @transform_5, window_bounds = array<i64: 8, 128>}]} {
    %c0_i32 = arith.constant 0 : i32
    %0 = arith.cmpi eq, %arg1, %c0_i32 : i32
    %1 = arith.extui %0 : i1 to i32
    %c0_i32_0 = arith.constant 0 : i32
    %2 = arith.cmpi ne, %1, %c0_i32_0 : i32
    scf.if %2 {
      %cst_16 = arith.constant 0.000000e+00 : f32
      %21 = vector.broadcast %cst_16 : f32 to vector<8x128xf32>
      %c0_17 = arith.constant 0 : index
      %c0_18 = arith.constant 0 : index
      %22 = vector.load %arg8[%c0_17, %c0_18] : memref<8x128xf32, #tpu.memory_space<vmem>>, vector<8x128xf32>
      tpu.vector_store %arg8[%c0_17, %c0_18], %21 {strides = array<i32>} : memref<8x128xf32, #tpu.memory_space<vmem>>, vector<8x128xf32>,
    } else {
    }
    %c0 = arith.constant 0 : index
    %c0_1 = arith.constant 0 : index
    %3 = vector.load %arg2[%c0, %c0_1] : memref<8x128xf32, #tpu.memory_space<vmem>>, vector<8x128xf32>
    %4 = arith.truncf %3 : vector<8x128xf32> to vector<8x128xbf16>
    %c0_2 = arith.constant 0 : index
    %c0_3 = arith.constant 0 : index
    %5 = vector.load %arg3[%c0_2, %c0_3] : memref<128x128xbf16, #tpu.memory_space<vmem>>, vector<128x128xbf16>
    %cst = arith.constant dense<0.000000e+00> : vector<8x128xf32>
    %6 = tpu.matmul %4, %5, %cst {dimension_numbers = #tpu.dot_dimension_numbers<[1], [0], [0], [1], [0, 0, 1, 1], [], []>} : vector<8x128xbf16>, vector<128x128xbf16>, vector<8x128xf32> -> vector<8x128xf32>
    %c0_4 = arith.constant 0 : index
    %c0_5 = arith.constant 0 : index
    %7 = vector.load %arg4[%c0_4, %c0_5] : memref<1x128xf32, #tpu.memory_space<vmem>>, vector<1x128xf32>
    %8 = vector.broadcast %7 : vector<1x128xf32> to vector<8x128xf32>
    %9 = arith.addf %6, %8 : vector<8x128xf32>
    %cst_6 = arith.constant 0.000000e+00 : f32
    %10 = vector.broadcast %cst_6 : f32 to vector<8x128xf32>
    %11 = arith.maximumf %9, %10 : vector<8x128xf32>
    %c0_7 = arith.constant 0 : index
    %c0_8 = arith.constant 0 : index
    %12 = vector.load %arg8[%c0_7, %c0_8] : memref<8x128xf32, #tpu.memory_space<vmem>>, vector<8x128xf32>
    %13 = arith.truncf %11 : vector<8x128xf32> to vector<8x128xbf16>
    %c0_9 = arith.constant 0 : index
    %c0_10 = arith.constant 0 : index
    %14 = vector.load %arg5[%c0_9, %c0_10] : memref<128x128xbf16, #tpu.memory_space<vmem>>, vector<128x128xbf16>
    %cst_11 = arith.constant dense<0.000000e+00> : vector<8x128xf32>
    %15 = tpu.matmul %13, %14, %cst_11 {dimension_numbers = #tpu.dot_dimension_numbers<[1], [0], [0], [1], [0, 0, 1, 1], [], []>} : vector<8x128xbf16>, vector<128x128xbf16>, vector<8x128xf32> -> vector<8x128xf32>
    %16 = arith.addf %12, %15 : vector<8x128xf32>
    %c0_12 = arith.constant 0 : index
    %c0_13 = arith.constant 0 : index
    %17 = vector.load %arg8[%c0_12, %c0_13] : memref<8x128xf32, #tpu.memory_space<vmem>>, vector<8x128xf32>
    tpu.vector_store %arg8[%c0_12, %c0_13], %16 {strides = array<i32>} : memref<8x128xf32, #tpu.memory_space<vmem>>, vector<8x128xf32>,
    %c0_i32_14 = arith.constant 0 : i32
    %18 = arith.cmpi eq, %arg1, %c0_i32_14 : i32
    %19 = arith.extui %18 : i1 to i32
    %c0_i32_15 = arith.constant 0 : i32
    %20 = arith.cmpi ne, %19, %c0_i32_15 : i32
    scf.if %20 {
      %c0_16 = arith.constant 0 : index
      %c0_17 = arith.constant 0 : index
      %21 = vector.load %arg8[%c0_16, %c0_17] : memref<8x128xf32, #tpu.memory_space<vmem>>, vector<8x128xf32>
      %c0_18 = arith.constant 0 : index
      %c0_19 = arith.constant 0 : index
      %22 = vector.load %arg6[%c0_18, %c0_19] : memref<1x128xf32, #tpu.memory_space<vmem>>, vector<1x128xf32>
      %23 = vector.broadcast %22 : vector<1x128xf32> to vector<8x128xf32>
      %24 = arith.addf %21, %23 : vector<8x128xf32>
      %c0_20 = arith.constant 0 : index
      %c0_21 = arith.constant 0 : index
      %25 = vector.load %arg7[%c0_20, %c0_21] : memref<8x128xf32, #tpu.memory_space<vmem>>, vector<8x128xf32>
      tpu.vector_store %arg7[%c0_20, %c0_21], %24 {strides = array<i32>} : memref<8x128xf32, #tpu.memory_space<vmem>>, vector<8x128xf32>,
    } else {
    }
    return
  }
  func.func @transform_0(%arg0: i32, %arg1: i32) -> (i32, i32) {
    %c0_i32 = arith.constant 0 : i32
    %c0_i32_0 = arith.constant 0 : i32
    return %arg0, %c0_i32 : i32, i32
  }
  func.func @transform_1(%arg0: i32, %arg1: i32) -> (i32, i32) {
    %c0_i32 = arith.constant 0 : i32
    %c0_i32_0 = arith.constant 0 : i32
    return %c0_i32, %arg1 : i32, i32
  }
  func.func @transform_2(%arg0: i32, %arg1: i32) -> (i32, i32) {
    %c0_i32 = arith.constant 0 : i32
    %c0_i32_0 = arith.constant 0 : i32
    return %c0_i32, %arg1 : i32, i32
  }
  func.func @transform_3(%arg0: i32, %arg1: i32) -> (i32, i32) {
    %c0_i32 = arith.constant 0 : i32
    %c0_i32_0 = arith.constant 0 : i32
    return %arg1, %c0_i32 : i32, i32
  }
  func.func @transform_4(%arg0: i32, %arg1: i32) -> (i32, i32) {
    %c0_i32 = arith.constant 0 : i32
    %c0_i32_0 = arith.constant 0 : i32
    %c0_i32_1 = arith.constant 0 : i32
    return %c0_i32, %c0_i32_0 : i32, i32
  }
  func.func @transform_5(%arg0: i32, %arg1: i32) -> (i32, i32) {
    %c0_i32 = arith.constant 0 : i32
    %c0_i32_0 = arith.constant 0 : i32
    return %arg0, %c0_i32 : i32, i32
  }
}

</mosaic_0001>

<llo_original>
// kernel: apply.1
$region0: #{apply.1}
  #allocation0 [shape = 'u32[]', space=smem, size = 0x4, offset = 0x4, fixed_abs, tag = 'smem constant byte address 0x4 - core index']
  #allocation1 [shape = 'u32[72,128]{1,0:T(1,128)}', space=vmem, size = 0x9000, scoped, tag = 'internal scratch']
  #allocation2 [shape = 'f32[8,128]{1,0:T(8,128)}', space=vmem, size = 0x1000, scoped, tag = 'scratch operand']
  %s0 = inlined_call_operand.vmem [shape: f32[16,128], index: 0, kind: input, shape index: {}]
  %s1 = inlined_call_operand.hbm [shape: bf16[128,128], index: 1, kind: input, shape index: {}]
  %s2 = inlined_call_operand.vmem [shape: f32[1,128], index: 2, kind: input, shape index: {}, may-alias: {2,4}]
  %s3 = inlined_call_operand.hbm [shape: bf16[128,128], index: 3, kind: input, shape index: {}]
  %s4 = inlined_call_operand.vmem [shape: f32[1,128], index: 4, kind: input, shape index: {}, may-alias: {2,4}]
  %s5 = inlined_call_operand.vmem [shape: f32[16,128], index: 5, kind: output, shape index: {}]
  %s6 = sld [smem:[#allocation0]]
  $region69: #{apply.1} parent=0
    _
  %s8 = ssub.s32 1, %s6
  %s9 = scalar_select 0, %s8, %s6
  $region1: #{apply.1} parent=0
    #allocation3 [shape = 'u8[32768]{0}', space=vmem, size = 0x8000, scoped, tag = 'input window, operand 1, single buffered']
    #allocation4 [shape = 's32[2]{0}', space=sflag, size = 0x8, scoped, tag = 'scoped memory for apply.1']
    #allocation5 [shape = 'u8[32768]{0}', space=vmem, size = 0x8000, scoped, tag = 'input window, operand 3, single buffered']
    #allocation6 [shape = 's32[1]{0}', space=sflag, size = 0x4, scoped, tag = 'scoped memory for apply.1']
    %10 = vsyncpa [#allocation4], 0
    %11 = vsyncpa [#allocation6], 0
    loop: start=0, step=1, limit=4
    $region2: #{apply.1} parent=1 // loop_pre_header
      _
    $region3: #{apply.1} parent=1 // loop_header
      %s13 = sphi 0, %s17
      %p14 = scmp.ge.s32.totalorder %s13, 4
      %s20 = sphi 0, %s32
      %s21 = sphi 0, %s28
      %s22 = sphi 0, %s20
      %s23 = sphi 0, %s21
      %s24 = sphi 0, %s22
      %s25 = sphi 0, %s23
      %s35 = sphi 0, %s37
      %s38 = sphi 0, %s35
      %s39 = sphi 0, %s38
      %s55 = sphi 0, %s39
      %s61 = sphi 0, %s63
      %s64 = sphi 0, %s61
      %s65 = sphi 0, %s64
      %s81 = sphi 0, %s65
      %s87 = sphi 0, %s89
      %s90 = sphi 0, %s87
      %s91 = sphi 0, %s90
      %s107 = sphi 0, %s91
      %s113 = sphi 0, %s115
      %s116 = sphi 0, %s113
      %s117 = sphi 0, %s116
      %s133 = sphi 0, %s117
      %s137 = sphi 0, %s137
      %s139 = sphi 0, %s137
      %s140 = sphi 0, %s139
      %s154 = sphi 0, %s140
      %s160 = sphi 0, %s162
      %s163 = sphi 0, %s160
      %s164 = sphi 0, %s163
      %s180 = sphi 0, %s164
    $region4: #{apply.1} parent=1 // loop_header_branch
      %16 = sbr.rel (%p14) target = $region8
    $region5: #{apply.1} parent=1 // loop_body
      %s18 = ssub.s32 %s13, 1
      %s19 = ssub.s32 %s13, 2
      %s26 = sadd.s32 1, %s21
      %p27 = scmp.ge.s32.totalorder %s26, 1
      %s28 = scalar_select %p27, 0, %s26
      %s29 = sadd.s32 1, %s20
      %s30 = scalar_select %p27, %s29, %s20
      %p31 = scmp.ge.s32.totalorder %s30, 2
      %s32 = scalar_select %p31, 0, %s30
      %s33 = ssub.s32 %s20, %s32
      %p34 = scmp.eq.s32.totalorder %s33, 0
      %s36 = sadd.s32 %s35, 1
      %s37 = scalar_select %p34, %s35, %s36
      %p40 = pneg %p34
      %p41 = scmp.eq.s32.totalorder %s13, 1
      %p42 = por %p40, %p41
      %p43 = scmp.ne.s32.totalorder %s35, %s38
      %p44 = scmp.eq.s32.totalorder %s13, 0
      %p45 = por %p43, %p44
      %p46 = scmp.ne.s32.totalorder %s35, %s38
      %p47 = scmp.eq.s32.totalorder %s18, 1
      %p48 = por %p46, %p47
      %p49 = scmp.ne.s32.totalorder %s38, %s39
      %p50 = scmp.eq.s32.totalorder %s18, 0
      %p51 = por %p49, %p50
      %p52 = scmp.ne.s32.totalorder %s38, %s39
      %p53 = scmp.eq.s32.totalorder %s19, 1
      %p54 = por %p52, %p53
      %p56 = scmp.ne.s32.totalorder %s39, %s55
      %p57 = scmp.eq.s32.totalorder %s19, 0
      %p58 = por %p56, %p57
      %s59 = ssub.s32 %s21, %s28
      %p60 = scmp.eq.s32.totalorder %s59, 0
      %s62 = sadd.s32 %s61, 1
      %s63 = scalar_select %p60, %s61, %s62
      %p66 = pneg %p60
      %p67 = scmp.eq.s32.totalorder %s13, 1
      %p68 = por %p66, %p67
      %p69 = scmp.ne.s32.totalorder %s61, %s64
      %p70 = scmp.eq.s32.totalorder %s13, 0
      %p71 = por %p69, %p70
      %p72 = scmp.ne.s32.totalorder %s61, %s64
      %p73 = scmp.eq.s32.totalorder %s18, 1
      %p74 = por %p72, %p73
      %p75 = scmp.ne.s32.totalorder %s64, %s65
      %p76 = scmp.eq.s32.totalorder %s18, 0
      %p77 = por %p75, %p76
      %p78 = scmp.ne.s32.totalorder %s64, %s65
      %p79 = scmp.eq.s32.totalorder %s19, 1
      %p80 = por %p78, %p79
      %p82 = scmp.ne.s32.totalorder %s65, %s81
      %p83 = scmp.eq.s32.totalorder %s19, 0
      %p84 = por %p82, %p83
      %s85 = ssub.s32 %s21, %s28
      %p86 = scmp.eq.s32.totalorder %s85, 0
      %s88 = sadd.s32 %s87, 1
      %s89 = scalar_select %p86, %s87, %s88
      %p92 = pneg %p86
      %p93 = scmp.eq.s32.totalorder %s13, 1
      %p94 = por %p92, %p93
      %p95 = scmp.ne.s32.totalorder %s87, %s90
      %p96 = scmp.eq.s32.totalorder %s13, 0
      %p97 = por %p95, %p96
      %p98 = scmp.ne.s32.totalorder %s87, %s90
      %p99 = scmp.eq.s32.totalorder %s18, 1
      %p100 = por %p98, %p99
      %p101 = scmp.ne.s32.totalorder %s90, %s91
      %p102 = scmp.eq.s32.totalorder %s18, 0
      %p103 = por %p101, %p102
      %p104 = scmp.ne.s32.totalorder %s90, %s91
      %p105 = scmp.eq.s32.totalorder %s19, 1
      %p106 = por %p104, %p105
      %p108 = scmp.ne.s32.totalorder %s91, %s107
      %p109 = scmp.eq.s32.totalorder %s19, 0
      %p110 = por %p108, %p109
      %s111 = ssub.s32 %s21, %s28
      %p112 = scmp.eq.s32.totalorder %s111, 0
      %s114 = sadd.s32 %s113, 1
      %s115 = scalar_select %p112, %s113, %s114
      %p118 = pneg %p112
      %p119 = scmp.eq.s32.totalorder %s13, 1
      %p120 = por %p118, %p119
      %p121 = scmp.ne.s32.totalorder %s113, %s116
      %p122 = scmp.eq.s32.totalorder %s13, 0
      %p123 = por %p121, %p122
      %p124 = scmp.ne.s32.totalorder %s113, %s116
      %p125 = scmp.eq.s32.totalorder %s18, 1
      %p126 = por %p124, %p125
      %p127 = scmp.ne.s32.totalorder %s116, %s117
      %p128 = scmp.eq.s32.totalorder %s18, 0
      %p129 = por %p127, %p128
      %p130 = scmp.ne.s32.totalorder %s116, %s117
      %p131 = scmp.eq.s32.totalorder %s19, 1
      %p132 = por %p130, %p131
      %p134 = scmp.ne.s32.totalorder %s117, %s133
      %p135 = scmp.eq.s32.totalorder %s19, 0
      %p136 = por %p134, %p135
      %s138 = sadd.s32 %s137, 1
      %p141 = scmp.eq.s32.totalorder %s13, 1
      %p142 = scmp.ne.s32.totalorder %s137, %s139
      %p143 = scmp.eq.s32.totalorder %s13, 0
      %p144 = por %p142, %p143
      %p145 = scmp.ne.s32.totalorder %s137, %s139
      %p146 = scmp.eq.s32.totalorder %s18, 1
      %p147 = por %p145, %p146
      %p148 = scmp.ne.s32.totalorder %s139, %s140
      %p149 = scmp.eq.s32.totalorder %s18, 0
      %p150 = por %p148, %p149
      %p151 = scmp.ne.s32.totalorder %s139, %s140
      %p152 = scmp.eq.s32.totalorder %s19, 1
      %p153 = por %p151, %p152
      %p155 = scmp.ne.s32.totalorder %s140, %s154
      %p156 = scmp.eq.s32.totalorder %s19, 0
      %p157 = por %p155, %p156
      %s158 = ssub.s32 %s20, %s32
      %p159 = scmp.eq.s32.totalorder %s158, 0
      %s161 = sadd.s32 %s160, 1
      %s162 = scalar_select %p159, %s160, %s161
      %p165 = pneg %p159
      %p166 = scmp.eq.s32.totalorder %s13, 1
      %p167 = por %p165, %p166
      %p168 = scmp.ne.s32.totalorder %s160, %s163
      %p169 = scmp.eq.s32.totalorder %s13, 0
      %p170 = por %p168, %p169
      %p171 = scmp.ne.s32.totalorder %s160, %s163
      %p172 = scmp.eq.s32.totalorder %s18, 1
      %p173 = por %p171, %p172
      %p174 = scmp.ne.s32.totalorder %s163, %s164
      %p175 = scmp.eq.s32.totalorder %s18, 0
      %p176 = por %p174, %p175
      %p177 = scmp.ne.s32.totalorder %s163, %s164
      %p178 = scmp.eq.s32.totalorder %s19, 1
      %p179 = por %p177, %p178
      %p181 = scmp.ne.s32.totalorder %s164, %s180
      %p182 = scmp.eq.s32.totalorder %s19, 0
      %p183 = por %p181, %p182
      %p184 = scmp.le.s32.totalorder 1, %s13
      %p185 = scmp.lt.s32.totalorder %s13, 3
      %p186 = pnand %p184, %p185
      %p187 = pneg %p186
      // Predicated region
      $region9: #{apply.1} parent=5 // pred_check
        _
      $region10: #{apply.1} parent=5 // pred_check_branch
        %189 = sbr.rel (%p186) target = $region12
      $region11: #{apply.1} parent=5 // pred_region
        %s190 = ssub.s32 %s13, 1
        // Predicated region
        $region13: #{apply.1} parent=11 // pred_check
          %p191 = pneg %p77
        $region14: #{apply.1} parent=11 // pred_check_branch
          %193 = sbr.rel (%p191) target = $region16
        $region15: #{apply.1} parent=11 // pred_region
          %195 = vsyncadd [#allocation4], 0
          %s196 = smul.addr %s23, 4
          %s197 = scalar_lea.hbm %s1, %s196
          %s198 = sshll.u32 %s197, 4
          %s199 = int_to_ptr.hbm [resolvable:$true] %s198
          %s200 = sshll.u32 [#allocation3], 4
          %s201 = int_to_ptr.vmem [resolvable:$true] %s200
          %206 = dma.hbm_to_vmem [thread:$0]  %s199, 1024, %s201, [#allocation4], 64, 64, 4
        $region16: #{apply.1} parent=11 // pred_fallthru
          _
        // Predicated region
        $region17: #{apply.1} parent=11 // pred_check
          %p207 = pneg %p103
        $region18: #{apply.1} parent=11 // pred_check_branch
          %209 = sbr.rel (%p207) target = $region20
        $region19: #{apply.1} parent=11 // pred_region
          %p210 = scmp.lt.s32.totalorder %s23, 0
          %s211 = scalar_select %p210, %s23, 0
          %s212 = scalar_lea.vmem %s2, %s211
        $region20: #{apply.1} parent=11 // pred_fallthru
          _
        // Predicated region
        $region21: #{apply.1} parent=11 // pred_check
          %p213 = pneg %p129
        $region22: #{apply.1} parent=11 // pred_check_branch
          %215 = sbr.rel (%p213) target = $region24
        $region23: #{apply.1} parent=11 // pred_region
          %s216 = smul.u32 16, %s23
          %218 = vsyncadd [#allocation6], 0
          %s219 = smul.addr %s216, 4
          %s220 = scalar_lea.hbm %s3, %s219
          %s221 = sshll.u32 %s220, 4
          %s222 = int_to_ptr.hbm [resolvable:$true] %s221
          %s223 = sshll.u32 [#allocation5], 4
          %s224 = int_to_ptr.vmem [resolvable:$true] %s223
          %229 = dma.hbm_to_vmem [thread:$0]  %s222, 1024, %s224, [#allocation6], 64, 64, 4
        $region24: #{apply.1} parent=11 // pred_fallthru
          _
        // Predicated region
        $region25: #{apply.1} parent=11 // pred_check
          %p230 = pneg %p150
        $region26: #{apply.1} parent=11 // pred_check_branch
          %232 = sbr.rel (%p230) target = $region28
        $region27: #{apply.1} parent=11 // pred_region
          _
        $region28: #{apply.1} parent=11 // pred_fallthru
          _
      $region12: #{apply.1} parent=5 // pred_fallthru
        _
      %p233 = scmp.lt.s32.totalorder %s13, 2
      // Predicated region
      $region29: #{apply.1} parent=5 // pred_check
        %p234 = pneg %p233
      $region30: #{apply.1} parent=5 // pred_check_branch
        %236 = sbr.rel (%p234) target = $region32
      $region31: #{apply.1} parent=5 // pred_region
        // Predicated region
        $region33: #{apply.1} parent=31 // pred_check
          %p237 = pneg %p45
        $region34: #{apply.1} parent=31 // pred_check_branch
          %239 = sbr.rel (%p237) target = $region36
        $region35: #{apply.1} parent=31 // pred_region
          %p240 = scmp.lt.s32.totalorder %s20, 1
          %s241 = scalar_select %p240, %s20, 1
          %s242 = smul.addr %s241, 8
          %s243 = scalar_lea.vmem %s0, %s242
        $region36: #{apply.1} parent=31 // pred_fallthru
          _
      $region32: #{apply.1} parent=5 // pred_fallthru
        _
      %p244 = scmp.le.s32.totalorder 1, %s13
      %p245 = scmp.lt.s32.totalorder %s13, 3
      %p246 = pnand %p244, %p245
      %p247 = pneg %p246
      // Predicated region
      $region37: #{apply.1} parent=5 // pred_check
        _
      $region38: #{apply.1} parent=5 // pred_check_branch
        %249 = sbr.rel (%p246) target = $region40
      $region39: #{apply.1} parent=5 // pred_region
        %s250 = ssub.s32 %s13, 1
        // Predicated region
        $region41: #{apply.1} parent=39 // pred_check
          %p251 = pneg %p77
        $region42: #{apply.1} parent=39 // pred_check_branch
          %253 = sbr.rel (%p251) target = $region44
        $region43: #{apply.1} parent=39 // pred_region
          %255 = dma.done [#allocation4], 1024
        $region44: #{apply.1} parent=39 // pred_fallthru
          _
        // Predicated region
        $region45: #{apply.1} parent=39 // pred_check
          %p256 = pneg %p129
        $region46: #{apply.1} parent=39 // pred_check_branch
          %258 = sbr.rel (%p256) target = $region48
        $region47: #{apply.1} parent=39 // pred_region
          %260 = dma.done [#allocation6], 1024
        $region48: #{apply.1} parent=39 // pred_fallthru
          _
        %p261 = scmp.lt.s32.totalorder %s22, 1
        %s262 = scalar_select %p261, %s22, 1
        %s263 = smul.addr %s262, 8
        %s264 = scalar_lea.vmem %s0, %s263
        %p265 = pneg %p51
        %p266 = pneg %p48
        %p267 = pneg %p77
        %p268 = pneg %p74
        %p269 = scmp.lt.s32.totalorder %s23, 0
        %s270 = scalar_select %p269, %s23, 0
        %s271 = scalar_lea.vmem %s2, %s270
        %p272 = pneg %p103
        %p273 = pneg %p100
        %p274 = pneg %p129
        %p275 = pneg %p126
        %p276 = pneg %p150
        %p277 = pneg %p147
        %p278 = pneg %p176
        %p279 = pneg %p173
        %p280 = scmp.lt.s32.totalorder %s22, 1
        %s281 = scalar_select %p280, %s22, 1
        %s282 = smul.addr %s281, 8
        %s283 = scalar_lea.vmem %s5, %s282
        %p284 = scmp.lt.s32.totalorder %s22, 1
        %s285 = scalar_select %p284, %s22, 1
        %s286 = smul.addr %s285, 8
        %s287 = scalar_lea.vmem %s0, %s286
        %p288 = scmp.lt.s32.totalorder %s23, 0
        %s289 = scalar_select %p288, %s23, 0
        %s290 = scalar_lea.vmem %s2, %s289
        %s291 = smul.u32 16, %s23
        %p292 = scmp.lt.s32.totalorder %s22, 1
        %s293 = scalar_select %p292, %s22, 1
        %s294 = smul.addr %s293, 8
        %s295 = scalar_lea.vmem %s5, %s294
        %p296 = scmp.eq.s32.totalorder %s23, 0
        // Predicated region
        $region49: #{apply.1} parent=39 // pred_check
          %p297 = pneg %p296
        $region50: #{apply.1} parent=39 // pred_check_branch
          %299 = sbr.rel (%p297) target = $region52
        $region51: #{apply.1} parent=39 // pred_region
          %300 = vst [vmem:[#allocation2] sm:$0xff] 0.0
        $region52: #{apply.1} parent=39 // pred_fallthru
          _
        %v301 = vld [vmem:[%s287] sm:$0xff]
        %v302 = vpack.c.bf16 %v301, %v301
        %v303 = vld [vmem:[#allocation3] sm:$0xf]
        %v304 = vld [vmem:[#allocation3 + $0x4] sm:$0xf]
        %v305 = vld [vmem:[#allocation3 + $0x8] sm:$0xf]
        %v306 = vld [vmem:[#allocation3 + $0xc] sm:$0xf]
        %v307 = vld [vmem:[#allocation3 + $0x10] sm:$0xf]
        %v308 = vld [vmem:[#allocation3 + $0x14] sm:$0xf]
        %v309 = vld [vmem:[#allocation3 + $0x18] sm:$0xf]
        %v310 = vld [vmem:[#allocation3 + $0x1c] sm:$0xf]
        %v311 = vld [vmem:[#allocation3 + $0x20] sm:$0xf]
        %v312 = vld [vmem:[#allocation3 + $0x24] sm:$0xf]
        %v313 = vld [vmem:[#allocation3 + $0x28] sm:$0xf]
        %v314 = vld [vmem:[#allocation3 + $0x2c] sm:$0xf]
        %v315 = vld [vmem:[#allocation3 + $0x30] sm:$0xf]
        %v316 = vld [vmem:[#allocation3 + $0x34] sm:$0xf]
        %v317 = vld [vmem:[#allocation3 + $0x38] sm:$0xf]
        %v318 = vld [vmem:[#allocation3 + $0x3c] sm:$0xf]
        %v319 = vld [vmem:[%s290] sm:$0x1]
        %v321 = vperm.slane %v319, 0
        %v339 = vunpack.c.l.b16 %v303
        %v340 = vunpack.c.l.b16 %v304
        %v341 = vunpack.c.l.b16 %v305
        %v342 = vunpack.c.l.b16 %v306
        %v343 = vunpack.c.l.b16 %v307
        %v344 = vunpack.c.l.b16 %v308
        %v345 = vunpack.c.l.b16 %v309
        %v346 = vunpack.c.l.b16 %v310
        %v347 = vunpack.c.l.b16 %v311
        %v348 = vunpack.c.l.b16 %v312
        %v349 = vunpack.c.l.b16 %v313
        %v350 = vunpack.c.l.b16 %v314
        %v351 = vunpack.c.l.b16 %v315
        %v352 = vunpack.c.l.b16 %v316
        %v353 = vunpack.c.l.b16 %v317
        %v354 = vunpack.c.l.b16 %v318
        %v355 = vpack.c.b16 %v340, %v339
        %v356 = vpack.c.b16 %v342, %v341
        %v357 = vpack.c.b16 %v344, %v343
        %v358 = vpack.c.b16 %v346, %v345
        %v359 = vpack.c.b16 %v348, %v347
        %v360 = vpack.c.b16 %v350, %v349
        %v361 = vpack.c.b16 %v352, %v351
        %v362 = vpack.c.b16 %v354, %v353
        %371 = vmatpush.bf16.msra.mxu0 %v362
        %372 = vmatpush.bf16.msra.mxu0 %v361
        %373 = vmatpush.bf16.msra.mxu0 %v360
        %374 = vmatpush.bf16.msra.mxu0 %v359
        %375 = vmatpush.bf16.msra.mxu0 %v358
        %376 = vmatpush.bf16.msra.mxu0 %v357
        %377 = vmatpush.bf16.msra.mxu0 %v356
        %378 = vmatpush.bf16.msra.mxu0 %v355
        %379 = vmatmul.bf16.gmra.mxu0 %v302
        %v380 = vpop.f32.mrf.mxu0
        %v381 = vadd.f32 %v321, %v380
        %v382 = vpop.f32.mrf.mxu0
        %383 = vdwg.mxu0
        %v384 = vmax.f32 %v381, 0.0
        %v385 = vld [vmem:[#allocation2] sm:$0xff]
        %v386 = vpack.c.bf16 %v384, %v384
        %v387 = vld [vmem:[#allocation5] sm:$0xf]
        %v388 = vld [vmem:[#allocation5 + $0x4] sm:$0xf]
        %v389 = vld [vmem:[#allocation5 + $0x8] sm:$0xf]
        %v390 = vld [vmem:[#allocation5 + $0xc] sm:$0xf]
        %v391 = vld [vmem:[#allocation5 + $0x10] sm:$0xf]
        %v392 = vld [vmem:[#allocation5 + $0x14] sm:$0xf]
        %v393 = vld [vmem:[#allocation5 + $0x18] sm:$0xf]
        %v394 = vld [vmem:[#allocation5 + $0x1c] sm:$0xf]
        %v395 = vld [vmem:[#allocation5 + $0x20] sm:$0xf]
        %v396 = vld [vmem:[#allocation5 + $0x24] sm:$0xf]
        %v397 = vld [vmem:[#allocation5 + $0x28] sm:$0xf]
        %v398 = vld [vmem:[#allocation5 + $0x2c] sm:$0xf]
        %v399 = vld [vmem:[#allocation5 + $0x30] sm:$0xf]
        %v400 = vld [vmem:[#allocation5 + $0x34] sm:$0xf]
        %v401 = vld [vmem:[#allocation5 + $0x38] sm:$0xf]
        %v402 = vld [vmem:[#allocation5 + $0x3c] sm:$0xf]
        %v419 = vunpack.c.l.b16 %v387
        %v420 = vunpack.c.l.b16 %v388
        %v421 = vunpack.c.l.b16 %v389
        %v422 = vunpack.c.l.b16 %v390
        %v423 = vunpack.c.l.b16 %v391
        %v424 = vunpack.c.l.b16 %v392
        %v425 = vunpack.c.l.b16 %v393
        %v426 = vunpack.c.l.b16 %v394
        %v427 = vunpack.c.l.b16 %v395
        %v428 = vunpack.c.l.b16 %v396
        %v429 = vunpack.c.l.b16 %v397
        %v430 = vunpack.c.l.b16 %v398
        %v431 = vunpack.c.l.b16 %v399
        %v432 = vunpack.c.l.b16 %v400
        %v433 = vunpack.c.l.b16 %v401
        %v434 = vunpack.c.l.b16 %v402
        %v435 = vpack.c.b16 %v420, %v419
        %v436 = vpack.c.b16 %v422, %v421
        %v437 = vpack.c.b16 %v424, %v423
        %v438 = vpack.c.b16 %v426, %v425
        %v439 = vpack.c.b16 %v428, %v427
        %v440 = vpack.c.b16 %v430, %v429
        %v441 = vpack.c.b16 %v432, %v431
        %v442 = vpack.c.b16 %v434, %v433
        %451 = vmatpush.bf16.msra.mxu0 %v442
        %452 = vmatpush.bf16.msra.mxu0 %v441
        %453 = vmatpush.bf16.msra.mxu0 %v440
        %454 = vmatpush.bf16.msra.mxu0 %v439
        %455 = vmatpush.bf16.msra.mxu0 %v438
        %456 = vmatpush.bf16.msra.mxu0 %v437
        %457 = vmatpush.bf16.msra.mxu0 %v436
        %458 = vmatpush.bf16.msra.mxu0 %v435
        %459 = vmatmul.bf16.gmra.mxu0 %v386
        %v460 = vpop.f32.mrf.mxu0
        %v461 = vadd.f32 0.0, %v460
        %v462 = vpop.f32.mrf.mxu0
        %463 = vdwg.mxu0
        %v464 = vadd.f32 %v385, %v461
        %465 = vst [vmem:[#allocation2] sm:$0xff] %v464
        // Predicated region
        $region53: #{apply.1} parent=39 // pred_check
          %p466 = pneg %p296
        $region54: #{apply.1} parent=39 // pred_check_branch
          %468 = sbr.rel (%p466) target = $region56
        $region55: #{apply.1} parent=39 // pred_region
          %v469 = vld [vmem:[#allocation2] sm:$0xff]
          %v470 = vld [vmem:[%s4] sm:$0x1]
          %v472 = vperm.slane %v470, 0
          %v474 = vadd.f32 %v469, %v472
          %475 = vst [vmem:[%s295] sm:$0xff] %v474
        $region56: #{apply.1} parent=39 // pred_fallthru
          _
        %p476 = scmp.lt.s32.totalorder %s22, 1
        %s477 = scalar_select %p476, %s22, 1
        %s478 = smul.addr %s477, 8
        %s479 = scalar_lea.vmem %s5, %s478
        // Predicated region
        $region57: #{apply.1} parent=39 // pred_check
          %p480 = pneg %p173
        $region58: #{apply.1} parent=39 // pred_check_branch
          %482 = sbr.rel (%p480) target = $region60
        $region59: #{apply.1} parent=39 // pred_region
          _
        $region60: #{apply.1} parent=39 // pred_fallthru
          _
      $region40: #{apply.1} parent=5 // pred_fallthru
        _
      %p483 = scmp.le.s32.totalorder 2, %s13
      // Predicated region
      $region61: #{apply.1} parent=5 // pred_check
        %p484 = pneg %p483
      $region62: #{apply.1} parent=5 // pred_check_branch
        %486 = sbr.rel (%p484) target = $region64
      $region63: #{apply.1} parent=5 // pred_region
        %s487 = ssub.s32 %s13, 2
        // Predicated region
        $region65: #{apply.1} parent=63 // pred_check
          %p488 = pneg %p179
        $region66: #{apply.1} parent=63 // pred_check_branch
          %490 = sbr.rel (%p488) target = $region68
        $region67: #{apply.1} parent=63 // pred_region
          %p491 = scmp.lt.s32.totalorder %s24, 1
          %s492 = scalar_select %p491, %s24, 1
          %s493 = smul.addr %s492, 8
          %s494 = scalar_lea.vmem %s5, %s493
        $region68: #{apply.1} parent=63 // pred_fallthru
          _
      $region64: #{apply.1} parent=5 // pred_fallthru
        _
    $region6: #{apply.1} parent=1 // loop_footer
      %s17 = sadd.s32 1, %s13
    $region7: #{apply.1} parent=1 // loop_footer_branch
      %12 = sbr.rel target = $region3
    $region8: #{apply.1} parent=1 // loop_exit
      _
    %495 = vsyncpa [#allocation4], 1
    %s496 = scalar_lea.sflag [#allocation4], 1
    %497 = vsyncpa %s496, 1
    %498 = vsyncpa [#allocation6], 1

</llo_original>
